<compile_context>
chip_gen: v7x
topology: tpu7x:2x2x1
jax: 0.10.0
libtpu: 0.0.40
codegen_flags: <defaults>
</compile_context>

<pallas_src>
import jax
import jax.numpy as jnp
from jax.experimental import pallas as pl
from jax.experimental.pallas import tpu as pltpu


def _pick_row_block(seq_len: int, max_ts: int = 512) -> int:
    """Largest divisor of seq_len that is a multiple of 8 and <= max_ts.
    Falls back to the full sequence (full-extent blocks are always legal)."""
    for ts in range(min(seq_len, max_ts), 7, -1):
        if seq_len % ts == 0 and ts % 8 == 0:
            return ts
    return seq_len


def text_embedding_forward(tokens, wte, wpe, attention_mask=None):
    """tokens: (B, S) int; wte: (V, D); wpe: (P, D); mask: (B, S) or None."""
    B, S = tokens.shape
    V, D = wte.shape

    TS = _pick_row_block(S)            # rows of output produced per grid step
    num_s_blocks = S // TS
    K = min(8, TS)                     # outstanding wte row-gather DMAs

    # Flat 1-D int32 token ids for SMEM scalar prefetch (avoids 2-D SMEM padding).
    tokens_flat = tokens.reshape(-1).astype(jnp.int32)

    def embed_kernel(tok_ref, wte_hbm, wpe_ref, out_ref, gather_buf, sems):
        # tok_ref:    (B*S,) int32 in SMEM (scalar prefetch)
        # wte_hbm:    (V, D) raw HBM ref (manual gather)
        # wpe_ref:    (TS, D) VMEM block (auto-pipelined, reused across batch)
        # out_ref:    (1, TS, D) VMEM output block
        # gather_buf: (TS, D) VMEM scratch for gathered wte rows
        # sems:       (K,) DMA semaphores
        si = pl.program_id(0)
        b = pl.program_id(1)
        base = b * S + si * TS

        def start_row(r):
            tok = tok_ref[base + r]
            pltpu.make_async_copy(
                wte_hbm.at[tok], gather_buf.at[r], sems.at[r % K]
            ).start()

        # Prologue: put K row-gather DMAs in flight.
        for r in range(K):
            start_row(r)

        # Sliding window: wait row r, immediately reuse its sem slot for row r+K.
        @pl.loop(0, TS)
        def _(r):
            pltpu.make_async_copy(
                wte_hbm.at[0], gather_buf.at[r], sems.at[r % K]
            ).wait()

            @pl.when(r + K < TS)
            def _():
                start_row(r + K)

        acc = gather_buf[...].astype(jnp.float32) + wpe_ref[...].astype(jnp.float32)
        out_ref[...] = acc.reshape(out_ref.shape).astype(out_ref.dtype)

    grid_spec = pltpu.PrefetchScalarGridSpec(
        num_scalar_prefetch=1,
        grid=(num_s_blocks, B),  # batch innermost -> wpe block reused across b
        in_specs=[
            pl.BlockSpec(memory_space=pl.ANY),                  # wte stays in HBM
            pl.BlockSpec((TS, D), lambda si, b, tok: (si, 0)),  # wpe slice
        ],
        out_specs=pl.BlockSpec((1, TS, D), lambda si, b, tok: (b, si, 0)),
        scratch_shapes=[
            pltpu.VMEM((TS, D), wte.dtype),
            pltpu.SemaphoreType.DMA((K,)),
        ],
    )

    hidden = pl.pallas_call(
        embed_kernel,
        out_shape=jax.ShapeDtypeStruct((B, S, D), wte.dtype),
        grid_spec=grid_spec,
        compiler_params=pltpu.CompilerParams(
            dimension_semantics=("parallel", "parallel"),
        ),
    )(tokens_flat, wte, wpe)

    # TODO(synk): nn.Dropout(embd_pdrop) omitted — identity at inference.
    # TODO(synk): optional token_type_ids branch (extra wte gather) not implemented.

    mask_bias = None
    if attention_mask is not None:
        # Trivial elementwise op: plain JAX (fused by XLA), kept in f32 then
        # cast to the embedding dtype — matches PyTorch's `.to(self.dtype)`.
        mask_bias = (
            (1.0 - attention_mask.astype(jnp.float32)) * -10000.0
        ).astype(wte.dtype).reshape(B, 1, 1, S)

    output_shape = (B, S, D)
    return hidden, mask_bias, output_shape


if __name__ == "__main__":
    # Small, GPT-2-shaped config
    vocab_size = 64
    max_position_embeddings = 32
    n_embd = 128
    B, S = 2, 8

    key = jax.random.PRNGKey(0)
    k_wte, k_wpe, k_tok, k_mask = jax.random.split(key, 4)

    wte = (0.02 * jax.random.normal(k_wte, (vocab_size, n_embd))).astype(jnp.float32)
    wpe = (0.02 * jax.random.normal(k_wpe, (max_position_embeddings, n_embd))).astype(
        jnp.float32
    )

    tokens = jax.random.randint(k_tok, (B, S), 0, vocab_size, dtype=jnp.int32)
    attention_mask = (jax.random.uniform(k_mask, (B, S)) > 0.2).astype(jnp.float32)

    hidden, mask_bias, out_shape = text_embedding_forward(
        tokens, wte, wpe, attention_mask
    )
    hidden = jax.block_until_ready(hidden)
    mask_bias = jax.block_until_ready(mask_bias)

    # Reference check (plain JAX)
    pos_ids = jnp.arange(S)
    ref_hidden = wte[tokens] + wpe[pos_ids][None, :, :]
    ref_bias = ((1.0 - attention_mask) * -10000.0).reshape(B, 1, 1, S)

    assert hidden.shape == (B, S, n_embd)
    assert mask_bias.shape == (B, 1, 1, S)
    assert out_shape == (B, S, n_embd)
    assert jnp.allclose(hidden, ref_hidden, atol=1e-6)
    assert jnp.allclose(mask_bias, ref_bias, atol=1e-6)

    print("KERNEL_OK")
</pallas_src>

<mosaic_0001>
module attributes {stable_mosaic.version = 11 : i64} {
  func.func @embed_kernel(%arg0: i32, %arg1: i32, %arg2: memref<16xi32, #tpu.memory_space<smem>>, %arg3: memref<64x128xf32, #tpu.memory_space<any>>, %arg4: memref<8x128xf32, #tpu.memory_space<vmem>>, %arg5: memref<1x8x128xf32, #tpu.memory_space<vmem>>, %arg6: memref<8x128xf32, #tpu.memory_space<vmem>>, %arg7: memref<8x!tpu.dma_semaphore, #tpu.memory_space<semaphore_mem>>) attributes {dimension_semantics = [#tpu.dimension_semantics<parallel>, #tpu.dimension_semantics<parallel>], iteration_bounds = array<i64: 1, 2>, scalar_prefetch = 1 : i64, scratch_operands = 2 : i64, tpu.core_type = #tpu.core_type<tc>, window_params = [{}, {transform_indices = @transform_1, window_bounds = array<i64: 8, 128>}, {transform_indices = @transform_2, window_bounds = array<i64: 1, 8, 128>}]} {
    %c8_i32 = arith.constant 8 : i32
    %0 = arith.muli %arg1, %c8_i32 : i32
    %c8_i32_0 = arith.constant 8 : i32
    %1 = arith.muli %arg0, %c8_i32_0 : i32
    %2 = arith.addi %0, %1 : i32
    %c0_i32 = arith.constant 0 : i32
    %3 = arith.addi %2, %c0_i32 : i32
    %4 = arith.index_cast %3 : i32 to index
    %5 = memref.load %arg2[%4] : memref<16xi32, #tpu.memory_space<smem>>
    %c0_i32_1 = arith.constant 0 : i32
    %c0_i32_2 = arith.constant 0 : i32
    %c0_i32_3 = arith.constant 0 : i32
    %6 = tpu.memref_slice %arg3[%5, %c0_i32_3] : memref<64x128xf32, #tpu.memory_space<any>> -> memref<1x128xf32, #tpu.memory_space<any>>
    %7 = tpu.memref_squeeze %6 : memref<1x128xf32, #tpu.memory_space<any>> -> memref<128xf32, #tpu.memory_space<any>>
    %c0_i32_4 = arith.constant 0 : i32
    %8 = tpu.memref_slice %arg6[%c0_i32_1, %c0_i32_4] : memref<8x128xf32, #tpu.memory_space<vmem>> -> memref<1x128xf32, #tpu.memory_space<vmem>>
    %9 = tpu.memref_squeeze %8 : memref<1x128xf32, #tpu.memory_space<vmem>> -> memref<128xf32, #tpu.memory_space<vmem>>
    %10 = tpu.memref_slice %arg7[%c0_i32_2] : memref<8x!tpu.dma_semaphore, #tpu.memory_space<semaphore_mem>> -> memref<1x!tpu.dma_semaphore, #tpu.memory_space<semaphore_mem>>
    %11 = tpu.memref_squeeze %10 : memref<1x!tpu.dma_semaphore, #tpu.memory_space<semaphore_mem>> -> memref<!tpu.dma_semaphore, #tpu.memory_space<semaphore_mem>>
    tpu.enqueue_dma source(%7 : memref<128xf32, #tpu.memory_space<any>>) target(%9 : memref<128xf32, #tpu.memory_space<vmem>>) target_semaphore(%11 : memref<!tpu.dma_semaphore, #tpu.memory_space<semaphore_mem>>)
    %c1_i32 = arith.constant 1 : i32
    %12 = arith.addi %2, %c1_i32 : i32
    %13 = arith.index_cast %12 : i32 to index
    %14 = memref.load %arg2[%13] : memref<16xi32, #tpu.memory_space<smem>>
    %c1_i32_5 = arith.constant 1 : i32
    %c1_i32_6 = arith.constant 1 : i32
    %c0_i32_7 = arith.constant 0 : i32
    %15 = tpu.memref_slice %arg3[%14, %c0_i32_7] : memref<64x128xf32, #tpu.memory_space<any>> -> memref<1x128xf32, #tpu.memory_space<any>>
    %16 = tpu.memref_squeeze %15 : memref<1x128xf32, #tpu.memory_space<any>> -> memref<128xf32, #tpu.memory_space<any>>
    %c0_i32_8 = arith.constant 0 : i32
    %17 = tpu.memref_slice %arg6[%c1_i32_5, %c0_i32_8] : memref<8x128xf32, #tpu.memory_space<vmem>> -> memref<1x128xf32, #tpu.memory_space<vmem>>
    %18 = tpu.memref_squeeze %17 : memref<1x128xf32, #tpu.memory_space<vmem>> -> memref<128xf32, #tpu.memory_space<vmem>>
    %19 = tpu.memref_slice %arg7[%c1_i32_6] : memref<8x!tpu.dma_semaphore, #tpu.memory_space<semaphore_mem>> -> memref<1x!tpu.dma_semaphore, #tpu.memory_space<semaphore_mem>>
    %20 = tpu.memref_squeeze %19 : memref<1x!tpu.dma_semaphore, #tpu.memory_space<semaphore_mem>> -> memref<!tpu.dma_semaphore, #tpu.memory_space<semaphore_mem>>
    tpu.enqueue_dma source(%16 : memref<128xf32, #tpu.memory_space<any>>) target(%18 : memref<128xf32, #tpu.memory_space<vmem>>) target_semaphore(%20 : memref<!tpu.dma_semaphore, #tpu.memory_space<semaphore_mem>>)
    %c2_i32 = arith.constant 2 : i32
    %21 = arith.addi %2, %c2_i32 : i32
    %22 = arith.index_cast %21 : i32 to index
    %23 = memref.load %arg2[%22] : memref<16xi32, #tpu.memory_space<smem>>
    %c2_i32_9 = arith.constant 2 : i32
    %c2_i32_10 = arith.constant 2 : i32
    %c0_i32_11 = arith.constant 0 : i32
    %24 = tpu.memref_slice %arg3[%23, %c0_i32_11] : memref<64x128xf32, #tpu.memory_space<any>> -> memref<1x128xf32, #tpu.memory_space<any>>
    %25 = tpu.memref_squeeze %24 : memref<1x128xf32, #tpu.memory_space<any>> -> memref<128xf32, #tpu.memory_space<any>>
    %c0_i32_12 = arith.constant 0 : i32
    %26 = tpu.memref_slice %arg6[%c2_i32_9, %c0_i32_12] : memref<8x128xf32, #tpu.memory_space<vmem>> -> memref<1x128xf32, #tpu.memory_space<vmem>>
    %27 = tpu.memref_squeeze %26 : memref<1x128xf32, #tpu.memory_space<vmem>> -> memref<128xf32, #tpu.memory_space<vmem>>
    %28 = tpu.memref_slice %arg7[%c2_i32_10] : memref<8x!tpu.dma_semaphore, #tpu.memory_space<semaphore_mem>> -> memref<1x!tpu.dma_semaphore, #tpu.memory_space<semaphore_mem>>
    %29 = tpu.memref_squeeze %28 : memref<1x!tpu.dma_semaphore, #tpu.memory_space<semaphore_mem>> -> memref<!tpu.dma_semaphore, #tpu.memory_space<semaphore_mem>>
    tpu.enqueue_dma source(%25 : memref<128xf32, #tpu.memory_space<any>>) target(%27 : memref<128xf32, #tpu.memory_space<vmem>>) target_semaphore(%29 : memref<!tpu.dma_semaphore, #tpu.memory_space<semaphore_mem>>)
    %c3_i32 = arith.constant 3 : i32
    %30 = arith.addi %2, %c3_i32 : i32
    %31 = arith.index_cast %30 : i32 to index
    %32 = memref.load %arg2[%31] : memref<16xi32, #tpu.memory_space<smem>>
    %c3_i32_13 = arith.constant 3 : i32
    %c3_i32_14 = arith.constant 3 : i32
    %c0_i32_15 = arith.constant 0 : i32
    %33 = tpu.memref_slice %arg3[%32, %c0_i32_15] : memref<64x128xf32, #tpu.memory_space<any>> -> memref<1x128xf32, #tpu.memory_space<any>>
    %34 = tpu.memref_squeeze %33 : memref<1x128xf32, #tpu.memory_space<any>> -> memref<128xf32, #tpu.memory_space<any>>
    %c0_i32_16 = arith.constant 0 : i32
    %35 = tpu.memref_slice %arg6[%c3_i32_13, %c0_i32_16] : memref<8x128xf32, #tpu.memory_space<vmem>> -> memref<1x128xf32, #tpu.memory_space<vmem>>
    %36 = tpu.memref_squeeze %35 : memref<1x128xf32, #tpu.memory_space<vmem>> -> memref<128xf32, #tpu.memory_space<vmem>>
    %37 = tpu.memref_slice %arg7[%c3_i32_14] : memref<8x!tpu.dma_semaphore, #tpu.memory_space<semaphore_mem>> -> memref<1x!tpu.dma_semaphore, #tpu.memory_space<semaphore_mem>>
    %38 = tpu.memref_squeeze %37 : memref<1x!tpu.dma_semaphore, #tpu.memory_space<semaphore_mem>> -> memref<!tpu.dma_semaphore, #tpu.memory_space<semaphore_mem>>
    tpu.enqueue_dma source(%34 : memref<128xf32, #tpu.memory_space<any>>) target(%36 : memref<128xf32, #tpu.memory_space<vmem>>) target_semaphore(%38 : memref<!tpu.dma_semaphore, #tpu.memory_space<semaphore_mem>>)
    %c4_i32 = arith.constant 4 : i32
    %39 = arith.addi %2, %c4_i32 : i32
    %40 = arith.index_cast %39 : i32 to index
    %41 = memref.load %arg2[%40] : memref<16xi32, #tpu.memory_space<smem>>
    %c4_i32_17 = arith.constant 4 : i32
    %c4_i32_18 = arith.constant 4 : i32
    %c0_i32_19 = arith.constant 0 : i32
    %42 = tpu.memref_slice %arg3[%41, %c0_i32_19] : memref<64x128xf32, #tpu.memory_space<any>> -> memref<1x128xf32, #tpu.memory_space<any>>
    %43 = tpu.memref_squeeze %42 : memref<1x128xf32, #tpu.memory_space<any>> -> memref<128xf32, #tpu.memory_space<any>>
    %c0_i32_20 = arith.constant 0 : i32
    %44 = tpu.memref_slice %arg6[%c4_i32_17, %c0_i32_20] : memref<8x128xf32, #tpu.memory_space<vmem>> -> memref<1x128xf32, #tpu.memory_space<vmem>>
    %45 = tpu.memref_squeeze %44 : memref<1x128xf32, #tpu.memory_space<vmem>> -> memref<128xf32, #tpu.memory_space<vmem>>
    %46 = tpu.memref_slice %arg7[%c4_i32_18] : memref<8x!tpu.dma_semaphore, #tpu.memory_space<semaphore_mem>> -> memref<1x!tpu.dma_semaphore, #tpu.memory_space<semaphore_mem>>
    %47 = tpu.memref_squeeze %46 : memref<1x!tpu.dma_semaphore, #tpu.memory_space<semaphore_mem>> -> memref<!tpu.dma_semaphore, #tpu.memory_space<semaphore_mem>>
    tpu.enqueue_dma source(%43 : memref<128xf32, #tpu.memory_space<any>>) target(%45 : memref<128xf32, #tpu.memory_space<vmem>>) target_semaphore(%47 : memref<!tpu.dma_semaphore, #tpu.memory_space<semaphore_mem>>)
    %c5_i32 = arith.constant 5 : i32
    %48 = arith.addi %2, %c5_i32 : i32
    %49 = arith.index_cast %48 : i32 to index
    %50 = memref.load %arg2[%49] : memref<16xi32, #tpu.memory_space<smem>>
    %c5_i32_21 = arith.constant 5 : i32
    %c5_i32_22 = arith.constant 5 : i32
    %c0_i32_23 = arith.constant 0 : i32
    %51 = tpu.memref_slice %arg3[%50, %c0_i32_23] : memref<64x128xf32, #tpu.memory_space<any>> -> memref<1x128xf32, #tpu.memory_space<any>>
    %52 = tpu.memref_squeeze %51 : memref<1x128xf32, #tpu.memory_space<any>> -> memref<128xf32, #tpu.memory_space<any>>
    %c0_i32_24 = arith.constant 0 : i32
    %53 = tpu.memref_slice %arg6[%c5_i32_21, %c0_i32_24] : memref<8x128xf32, #tpu.memory_space<vmem>> -> memref<1x128xf32, #tpu.memory_space<vmem>>
    %54 = tpu.memref_squeeze %53 : memref<1x128xf32, #tpu.memory_space<vmem>> -> memref<128xf32, #tpu.memory_space<vmem>>
    %55 = tpu.memref_slice %arg7[%c5_i32_22] : memref<8x!tpu.dma_semaphore, #tpu.memory_space<semaphore_mem>> -> memref<1x!tpu.dma_semaphore, #tpu.memory_space<semaphore_mem>>
    %56 = tpu.memref_squeeze %55 : memref<1x!tpu.dma_semaphore, #tpu.memory_space<semaphore_mem>> -> memref<!tpu.dma_semaphore, #tpu.memory_space<semaphore_mem>>
    tpu.enqueue_dma source(%52 : memref<128xf32, #tpu.memory_space<any>>) target(%54 : memref<128xf32, #tpu.memory_space<vmem>>) target_semaphore(%56 : memref<!tpu.dma_semaphore, #tpu.memory_space<semaphore_mem>>)
    %c6_i32 = arith.constant 6 : i32
    %57 = arith.addi %2, %c6_i32 : i32
    %58 = arith.index_cast %57 : i32 to index
    %59 = memref.load %arg2[%58] : memref<16xi32, #tpu.memory_space<smem>>
    %c6_i32_25 = arith.constant 6 : i32
    %c6_i32_26 = arith.constant 6 : i32
    %c0_i32_27 = arith.constant 0 : i32
    %60 = tpu.memref_slice %arg3[%59, %c0_i32_27] : memref<64x128xf32, #tpu.memory_space<any>> -> memref<1x128xf32, #tpu.memory_space<any>>
    %61 = tpu.memref_squeeze %60 : memref<1x128xf32, #tpu.memory_space<any>> -> memref<128xf32, #tpu.memory_space<any>>
    %c0_i32_28 = arith.constant 0 : i32
    %62 = tpu.memref_slice %arg6[%c6_i32_25, %c0_i32_28] : memref<8x128xf32, #tpu.memory_space<vmem>> -> memref<1x128xf32, #tpu.memory_space<vmem>>
    %63 = tpu.memref_squeeze %62 : memref<1x128xf32, #tpu.memory_space<vmem>> -> memref<128xf32, #tpu.memory_space<vmem>>
    %64 = tpu.memref_slice %arg7[%c6_i32_26] : memref<8x!tpu.dma_semaphore, #tpu.memory_space<semaphore_mem>> -> memref<1x!tpu.dma_semaphore, #tpu.memory_space<semaphore_mem>>
    %65 = tpu.memref_squeeze %64 : memref<1x!tpu.dma_semaphore, #tpu.memory_space<semaphore_mem>> -> memref<!tpu.dma_semaphore, #tpu.memory_space<semaphore_mem>>
    tpu.enqueue_dma source(%61 : memref<128xf32, #tpu.memory_space<any>>) target(%63 : memref<128xf32, #tpu.memory_space<vmem>>) target_semaphore(%65 : memref<!tpu.dma_semaphore, #tpu.memory_space<semaphore_mem>>)
    %c7_i32 = arith.constant 7 : i32
    %66 = arith.addi %2, %c7_i32 : i32
    %67 = arith.index_cast %66 : i32 to index
    %68 = memref.load %arg2[%67] : memref<16xi32, #tpu.memory_space<smem>>
    %c7_i32_29 = arith.constant 7 : i32
    %c7_i32_30 = arith.constant 7 : i32
    %c0_i32_31 = arith.constant 0 : i32
    %69 = tpu.memref_slice %arg3[%68, %c0_i32_31] : memref<64x128xf32, #tpu.memory_space<any>> -> memref<1x128xf32, #tpu.memory_space<any>>
    %70 = tpu.memref_squeeze %69 : memref<1x128xf32, #tpu.memory_space<any>> -> memref<128xf32, #tpu.memory_space<any>>
    %c0_i32_32 = arith.constant 0 : i32
    %71 = tpu.memref_slice %arg6[%c7_i32_29, %c0_i32_32] : memref<8x128xf32, #tpu.memory_space<vmem>> -> memref<1x128xf32, #tpu.memory_space<vmem>>
    %72 = tpu.memref_squeeze %71 : memref<1x128xf32, #tpu.memory_space<vmem>> -> memref<128xf32, #tpu.memory_space<vmem>>
    %73 = tpu.memref_slice %arg7[%c7_i32_30] : memref<8x!tpu.dma_semaphore, #tpu.memory_space<semaphore_mem>> -> memref<1x!tpu.dma_semaphore, #tpu.memory_space<semaphore_mem>>
    %74 = tpu.memref_squeeze %73 : memref<1x!tpu.dma_semaphore, #tpu.memory_space<semaphore_mem>> -> memref<!tpu.dma_semaphore, #tpu.memory_space<semaphore_mem>>
    tpu.enqueue_dma source(%70 : memref<128xf32, #tpu.memory_space<any>>) target(%72 : memref<128xf32, #tpu.memory_space<vmem>>) target_semaphore(%74 : memref<!tpu.dma_semaphore, #tpu.memory_space<semaphore_mem>>)
    %c0_i32_33 = arith.constant 0 : i32
    %c8_i32_34 = arith.constant 8 : i32
    %75 = arith.addi %c0_i32_33, %c8_i32_34 : i32
    %c1_i32_35 = arith.constant 1 : i32
    scf.for %arg8 = %c0_i32_33 to %75 step %c1_i32_35  : i32 {
      %c1_i32_43 = arith.constant 1 : i32
      %81 = arith.muli %arg8, %c1_i32_43 : i32
      %c0_i32_44 = arith.constant 0 : i32
      %82 = arith.addi %c0_i32_44, %81 : i32
      %c8_i32_45 = arith.constant 8 : i32
      %c0_i32_46 = arith.constant 0 : i32
      %83 = arith.cmpi eq, %c8_i32_45, %c0_i32_46 : i32
      %c1_i32_47 = arith.constant 1 : i32
      %84 = arith.select %83, %c1_i32_47, %c8_i32_45 : i32
      %85 = arith.remsi %82, %84 : i32
      %c0_i32_48 = arith.constant 0 : i32
      %86 = arith.cmpi ne, %85, %c0_i32_48 : i32
      %c0_i32_49 = arith.constant 0 : i32
      %87 = arith.cmpi slt, %85, %c0_i32_49 : i32
      %c0_i32_50 = arith.constant 0 : i32
      %88 = arith.cmpi slt, %84, %c0_i32_50 : i32
      %89 = arith.xori %87, %88 : i1
      %90 = arith.andi %89, %86 : i1
      %91 = arith.addi %85, %84 : i32
      %92 = arith.select %90, %91, %85 : i32
      %c0_i32_51 = arith.constant 0 : i32
      %c0_i32_52 = arith.constant 0 : i32
      %93 = tpu.memref_slice %arg3[%c0_i32_51, %c0_i32_52] : memref<64x128xf32, #tpu.memory_space<any>> -> memref<1x128xf32, #tpu.memory_space<any>>
      %94 = tpu.memref_squeeze %93 : memref<1x128xf32, #tpu.memory_space<any>> -> memref<128xf32, #tpu.memory_space<any>>
      %c0_i32_53 = arith.constant 0 : i32
      %95 = tpu.memref_slice %arg6[%82, %c0_i32_53] : memref<8x128xf32, #tpu.memory_space<vmem>> -> memref<1x128xf32, #tpu.memory_space<vmem>>
      %96 = tpu.memref_squeeze %95 : memref<1x128xf32, #tpu.memory_space<vmem>> -> memref<128xf32, #tpu.memory_space<vmem>>
      %97 = tpu.memref_slice %arg7[%92] : memref<8x!tpu.dma_semaphore, #tpu.memory_space<semaphore_mem>> -> memref<1x!tpu.dma_semaphore, #tpu.memory_space<semaphore_mem>>
      %98 = tpu.memref_squeeze %97 : memref<1x!tpu.dma_semaphore, #tpu.memory_space<semaphore_mem>> -> memref<!tpu.dma_semaphore, #tpu.memory_space<semaphore_mem>>
      tpu.wait_dma2 semaphore(%98 : memref<!tpu.dma_semaphore, #tpu.memory_space<semaphore_mem>>) src(%94 : memref<128xf32, #tpu.memory_space<any>>) dst(%96 : memref<128xf32, #tpu.memory_space<vmem>>)
      %c8_i32_54 = arith.constant 8 : i32
      %99 = arith.addi %82, %c8_i32_54 : i32
      %c8_i32_55 = arith.constant 8 : i32
      %100 = arith.cmpi slt, %99, %c8_i32_55 : i32
      %101 = arith.extui %100 : i1 to i32
      %c0_i32_56 = arith.constant 0 : i32
      %102 = arith.cmpi ne, %101, %c0_i32_56 : i32
      scf.if %102 {
        %c8_i32_57 = arith.constant 8 : i32
        %103 = arith.addi %82, %c8_i32_57 : i32
        %104 = arith.addi %2, %103 : i32
        %105 = arith.index_cast %104 : i32 to index
        %106 = memref.load %arg2[%105] : memref<16xi32, #tpu.memory_space<smem>>
        %c8_i32_58 = arith.constant 8 : i32
        %c0_i32_59 = arith.constant 0 : i32
        %107 = arith.cmpi eq, %c8_i32_58, %c0_i32_59 : i32
        %c1_i32_60 = arith.constant 1 : i32
        %108 = arith.select %107, %c1_i32_60, %c8_i32_58 : i32
        %109 = arith.remsi %103, %108 : i32
        %c0_i32_61 = arith.constant 0 : i32
        %110 = arith.cmpi ne, %109, %c0_i32_61 : i32
        %c0_i32_62 = arith.constant 0 : i32
        %111 = arith.cmpi slt, %109, %c0_i32_62 : i32
        %c0_i32_63 = arith.constant 0 : i32
        %112 = arith.cmpi slt, %108, %c0_i32_63 : i32
        %113 = arith.xori %111, %112 : i1
        %114 = arith.andi %113, %110 : i1
        %115 = arith.addi %109, %108 : i32
        %116 = arith.select %114, %115, %109 : i32
        %c0_i32_64 = arith.constant 0 : i32
        %117 = tpu.memref_slice %arg3[%106, %c0_i32_64] : memref<64x128xf32, #tpu.memory_space<any>> -> memref<1x128xf32, #tpu.memory_space<any>>
        %118 = tpu.memref_squeeze %117 : memref<1x128xf32, #tpu.memory_space<any>> -> memref<128xf32, #tpu.memory_space<any>>
        %c0_i32_65 = arith.constant 0 : i32
        %119 = tpu.memref_slice %arg6[%103, %c0_i32_65] : memref<8x128xf32, #tpu.memory_space<vmem>> -> memref<1x128xf32, #tpu.memory_space<vmem>>
        %120 = tpu.memref_squeeze %119 : memref<1x128xf32, #tpu.memory_space<vmem>> -> memref<128xf32, #tpu.memory_space<vmem>>
        %121 = tpu.memref_slice %arg7[%116] : memref<8x!tpu.dma_semaphore, #tpu.memory_space<semaphore_mem>> -> memref<1x!tpu.dma_semaphore, #tpu.memory_space<semaphore_mem>>
        %122 = tpu.memref_squeeze %121 : memref<1x!tpu.dma_semaphore, #tpu.memory_space<semaphore_mem>> -> memref<!tpu.dma_semaphore, #tpu.memory_space<semaphore_mem>>
        tpu.enqueue_dma source(%118 : memref<128xf32, #tpu.memory_space<any>>) target(%120 : memref<128xf32, #tpu.memory_space<vmem>>) target_semaphore(%122 : memref<!tpu.dma_semaphore, #tpu.memory_space<semaphore_mem>>)
      } else {
      }
    }
    %c8_i32_36 = arith.constant 8 : i32
    %c0 = arith.constant 0 : index
    %c0_37 = arith.constant 0 : index
    %76 = vector.load %arg6[%c0, %c0_37] : memref<8x128xf32, #tpu.memory_space<vmem>>, vector<8x128xf32>
    %c0_38 = arith.constant 0 : index
    %c0_39 = arith.constant 0 : index
    %77 = vector.load %arg4[%c0_38, %c0_39] : memref<8x128xf32, #tpu.memory_space<vmem>>, vector<8x128xf32>
    %78 = arith.addf %76, %77 : vector<8x128xf32>
    %79 = vector.shape_cast %78 : vector<8x128xf32> to vector<1x8x128xf32>
    %c0_40 = arith.constant 0 : index
    %c0_41 = arith.constant 0 : index
    %c0_42 = arith.constant 0 : index
    %80 = vector.load %arg5[%c0_40, %c0_41, %c0_42] : memref<1x8x128xf32, #tpu.memory_space<vmem>>, vector<1x8x128xf32>
    tpu.vector_store %arg5[%c0_40, %c0_41, %c0_42], %79 {strides = array<i32>} : memref<1x8x128xf32, #tpu.memory_space<vmem>>, vector<1x8x128xf32>,
    return
  }
  func.func @transform_1(%arg0: i32, %arg1: i32, %arg2: memref<16xi32, #tpu.memory_space<smem>>) -> (i32, i32) {
    %c0_i32 = arith.constant 0 : i32
    %c0_i32_0 = arith.constant 0 : i32
    return %arg0, %c0_i32 : i32, i32
  }
  func.func @transform_2(%arg0: i32, %arg1: i32, %arg2: memref<16xi32, #tpu.memory_space<smem>>) -> (i32, i32, i32) {
    %c0_i32 = arith.constant 0 : i32
    %c0_i32_0 = arith.constant 0 : i32
    return %arg1, %arg0, %c0_i32 : i32, i32, i32
  }
}

</mosaic_0001>

<llo_original>
// kernel: tpu_custom_call.1
$region0: #{tpu_custom_call.1}
  #allocation0 [shape = 'u32[]', space=smem, size = 0x4, offset = 0x4, fixed_abs, tag = 'smem constant byte address 0x4 - core index']
  #allocation1 [shape = 'u32[144,128]{1,0:T(1,128)}', space=vmem, size = 0x12000, scoped, tag = 'internal scratch']
  #allocation2 [shape = 'f32[8,128]{1,0:T(8,128)}', space=vmem, size = 0x1000, scoped, tag = 'scratch operand']
  #allocation3 [shape = 's32[8]{0}', space=sflag, size = 0x20, scoped, tag = 'scratch operand']
  #allocation4 [shape = 's32[1]{0}', space=sflag, size = 0x4, scoped, tag = 'scoped memory for tpu_custom_call.1']
  #allocation5 [shape = 'u8[512]{0}', space=smem, size = 0x200, scoped, tag = 'prefetched SMEM operand 0']
  #allocation10 [shape = 's32[]', space=sflag, size = 0x4, offset = 0, fixed_abs, tag = 'sflag constant byte address 0x0 - dummy sync flag']
  #allocation11 [shape = 's32[]', space=sflag, size = 0x4, offset = 0, fixed_abs, tag = 'sflag constant byte address 0x0 - dummy sync flag']
  #allocation12 [shape = 'u32[]', space=smem, size = 0x4, offset = 0x44, fixed_abs, tag = 'smem constant byte address 0x44 - assertion arg 0']
  #allocation13 [shape = 'u32[]', space=smem, size = 0x4, offset = 0x48, fixed_abs, tag = 'smem constant byte address 0x48 - assertion arg 1']
  #allocation14 [shape = 's32[]', space=sflag, size = 0x4, offset = 0, fixed_abs, tag = 'sflag constant byte address 0x0 - dummy sync flag']
  #allocation15 [shape = 's32[]', space=sflag, size = 0x4, offset = 0, fixed_abs, tag = 'sflag constant byte address 0x0 - dummy sync flag']
  #allocation16 [shape = 's32[]', space=sflag, size = 0x4, offset = 0, fixed_abs, tag = 'sflag constant byte address 0x0 - dummy sync flag']
  #allocation17 [shape = 's32[]', space=sflag, size = 0x4, offset = 0, fixed_abs, tag = 'sflag constant byte address 0x0 - dummy sync flag']
  #allocation18 [shape = 's32[]', space=sflag, size = 0x4, offset = 0, fixed_abs, tag = 'sflag constant byte address 0x0 - dummy sync flag']
  #allocation19 [shape = 's32[]', space=sflag, size = 0x4, offset = 0, fixed_abs, tag = 'sflag constant byte address 0x0 - dummy sync flag']
  #allocation20 [shape = 's32[]', space=sflag, size = 0x4, offset = 0, fixed_abs, tag = 'sflag constant byte address 0x0 - dummy sync flag']
  #allocation21 [shape = 's32[]', space=sflag, size = 0x4, offset = 0, fixed_abs, tag = 'sflag constant byte address 0x0 - dummy sync flag']
  #allocation22 [shape = 's32[]', space=sflag, size = 0x4, offset = 0, fixed_abs, tag = 'sflag constant byte address 0x0 - dummy sync flag']
  #allocation23 [shape = 's32[]', space=sflag, size = 0x4, offset = 0, fixed_abs, tag = 'sflag constant byte address 0x0 - dummy sync flag']
  #allocation24 [shape = 's32[]', space=sflag, size = 0x4, offset = 0, fixed_abs, tag = 'sflag constant byte address 0x0 - dummy sync flag']
  #allocation25 [shape = 's32[]', space=sflag, size = 0x4, offset = 0, fixed_abs, tag = 'sflag constant byte address 0x0 - dummy sync flag']
  #allocation26 [shape = 's32[]', space=sflag, size = 0x4, offset = 0, fixed_abs, tag = 'sflag constant byte address 0x0 - dummy sync flag']
  #allocation27 [shape = 's32[]', space=sflag, size = 0x4, offset = 0, fixed_abs, tag = 'sflag constant byte address 0x0 - dummy sync flag']
  #allocation28 [shape = 's32[]', space=sflag, size = 0x4, offset = 0, fixed_abs, tag = 'sflag constant byte address 0x0 - dummy sync flag']
  #allocation29 [shape = 's32[]', space=sflag, size = 0x4, offset = 0, fixed_abs, tag = 'sflag constant byte address 0x0 - dummy sync flag']
  %s0 = inlined_call_operand.hbm [shape: s32[16], index: 0, kind: input, shape index: {}]
  %s1 = inlined_call_operand.hbm [shape: f32[64,128], index: 1, kind: input, shape index: {}]
  %s2 = inlined_call_operand.hbm [shape: f32[32,128], index: 2, kind: input, shape index: {}]
  %s3 = inlined_call_operand.hbm [shape: f32[2,8,128], index: 3, kind: output, shape index: {}]
  %s4 = sld [smem:[#allocation0]]
  $region88: #{tpu_custom_call.1} parent=0
    _
  %s6 = ssub.s32 1, %s4
  %s7 = scalar_select 0, %s6, %s4
  %9 = dma.hbm_to_smem %s0, 16, [#allocation5], [#allocation4]
  %10 = dma.done [#allocation4], 16
  %11 = sfence
  $region1: #{tpu_custom_call.1} parent=0
    #allocation6 [shape = 'u8[4096]{0}', space=vmem, size = 0x1000, scoped, tag = 'input window, operand 2, single buffered']
    #allocation7 [shape = 's32[2]{0}', space=sflag, size = 0x8, scoped, tag = 'scoped memory for tpu_custom_call.1']
    #allocation8 [shape = 's32[2]{0}', space=sflag, size = 0x8, scoped, tag = 'scoped memory for tpu_custom_call.1']
    #allocation9 [shape = 'u8[8192]{0}', space=vmem, size = 0x2000, scoped, tag = 'output window, operand 0']
    %12 = vsyncpa [#allocation7], 0
    %13 = vsyncpa [#allocation8], 0
    %s14 = scalar_lea.sflag [#allocation8], 1
    %15 = vsyncpa %s14, 0
    loop: start=0, step=1, limit=4
    $region2: #{tpu_custom_call.1} parent=1 // loop_pre_header
      _
    $region3: #{tpu_custom_call.1} parent=1 // loop_header
      %s17 = sphi 0, %s21
      %p18 = scmp.ge.s32.totalorder %s17, 4
      %s24 = sphi 0, %s36
      %s25 = sphi 0, %s32
      %s26 = sphi 0, %s24
      %s27 = sphi 0, %s25
      %s28 = sphi 0, %s26
      %s29 = sphi 0, %s27
      %s39 = sphi 0, %s41
      %s42 = sphi 0, %s39
      %s43 = sphi 0, %s42
      %s59 = sphi 0, %s43
      %s67 = sphi 0, %s69
      %s70 = sphi 0, %s67
      %s71 = sphi 0, %s70
      %s87 = sphi 0, %s71
    $region4: #{tpu_custom_call.1} parent=1 // loop_header_branch
      %20 = sbr.rel (%p18) target = $region8
    $region5: #{tpu_custom_call.1} parent=1 // loop_body
      %s22 = ssub.s32 %s17, 1
      %s23 = ssub.s32 %s17, 2
      %s30 = sadd.s32 1, %s25
      %p31 = scmp.ge.s32.totalorder %s30, 2
      %s32 = scalar_select %p31, 0, %s30
      %s33 = sadd.s32 1, %s24
      %s34 = scalar_select %p31, %s33, %s24
      %p35 = scmp.ge.s32.totalorder %s34, 1
      %s36 = scalar_select %p35, 0, %s34
      %s37 = ssub.s32 %s24, %s36
      %p38 = scmp.eq.s32.totalorder %s37, 0
      %s40 = sadd.s32 %s39, 1
      %s41 = scalar_select %p38, %s39, %s40
      %p44 = pneg %p38
      %p45 = scmp.eq.s32.totalorder %s17, 1
      %p46 = por %p44, %p45
      %p47 = scmp.ne.s32.totalorder %s39, %s42
      %p48 = scmp.eq.s32.totalorder %s17, 0
      %p49 = por %p47, %p48
      %p50 = scmp.ne.s32.totalorder %s39, %s42
      %p51 = scmp.eq.s32.totalorder %s22, 1
      %p52 = por %p50, %p51
      %p53 = scmp.ne.s32.totalorder %s42, %s43
      %p54 = scmp.eq.s32.totalorder %s22, 0
      %p55 = por %p53, %p54
      %p56 = scmp.ne.s32.totalorder %s42, %s43
      %p57 = scmp.eq.s32.totalorder %s23, 1
      %p58 = por %p56, %p57
      %p60 = scmp.ne.s32.totalorder %s43, %s59
      %p61 = scmp.eq.s32.totalorder %s23, 0
      %p62 = por %p60, %p61
      %s63 = ssub.s32 %s25, %s32
      %s64 = ssub.s32 %s24, %s36
      %s65 = sor.u32 %s63, %s64
      %p66 = scmp.eq.s32.totalorder %s65, 0
      %s68 = sadd.s32 %s67, 1
      %s69 = scalar_select %p66, %s67, %s68
      %p72 = pneg %p66
      %p73 = scmp.eq.s32.totalorder %s17, 1
      %p74 = por %p72, %p73
      %p75 = scmp.ne.s32.totalorder %s67, %s70
      %p76 = scmp.eq.s32.totalorder %s17, 0
      %p77 = por %p75, %p76
      %p78 = scmp.ne.s32.totalorder %s67, %s70
      %p79 = scmp.eq.s32.totalorder %s22, 1
      %p80 = por %p78, %p79
      %p81 = scmp.ne.s32.totalorder %s70, %s71
      %p82 = scmp.eq.s32.totalorder %s22, 0
      %p83 = por %p81, %p82
      %p84 = scmp.ne.s32.totalorder %s70, %s71
      %p85 = scmp.eq.s32.totalorder %s23, 1
      %p86 = por %p84, %p85
      %p88 = scmp.ne.s32.totalorder %s71, %s87
      %p89 = scmp.eq.s32.totalorder %s23, 0
      %p90 = por %p88, %p89
      %p91 = scmp.le.s32.totalorder 1, %s17
      %p92 = scmp.lt.s32.totalorder %s17, 3
      %p93 = pnand %p91, %p92
      %p94 = pneg %p93
      // Predicated region
      $region9: #{tpu_custom_call.1} parent=5 // pred_check
        _
      $region10: #{tpu_custom_call.1} parent=5 // pred_check_branch
        %96 = sbr.rel (%p93) target = $region12
      $region11: #{tpu_custom_call.1} parent=5 // pred_region
        %s97 = ssub.s32 %s17, 1
        // Predicated region
        $region13: #{tpu_custom_call.1} parent=11 // pred_check
          %p98 = pneg %p55
        $region14: #{tpu_custom_call.1} parent=11 // pred_check_branch
          %100 = sbr.rel (%p98) target = $region16
        $region15: #{tpu_custom_call.1} parent=11 // pred_region
          %s102 = ssub.s32 128, 128
          %103 = vsyncadd [#allocation7], %s102
          %s104 = smul.addr %s26, 128
          %s105 = scalar_lea.hbm %s2, %s104
          %s107 = sshll.u32 [#allocation6], 4
          %s108 = int_to_ptr.vmem [resolvable:$true] %s107
          %110 = dma.hbm_to_vmem [thread:$0]  %s105, 128, %s108, [#allocation7]
        $region16: #{tpu_custom_call.1} parent=11 // pred_fallthru
          _
      $region12: #{tpu_custom_call.1} parent=5 // pred_fallthru
        _
      %p111 = scmp.lt.s32.totalorder %s17, 2
      // Predicated region
      $region17: #{tpu_custom_call.1} parent=5 // pred_check
        %p112 = pneg %p111
      $region18: #{tpu_custom_call.1} parent=5 // pred_check_branch
        %114 = sbr.rel (%p112) target = $region20
      $region19: #{tpu_custom_call.1} parent=5 // pred_region
        _
      $region20: #{tpu_custom_call.1} parent=5 // pred_fallthru
        _
      %p115 = scmp.le.s32.totalorder 1, %s17
      %p116 = scmp.lt.s32.totalorder %s17, 3
      %p117 = pnand %p115, %p116
      %p118 = pneg %p117
      // Predicated region
      $region21: #{tpu_custom_call.1} parent=5 // pred_check
        _
      $region22: #{tpu_custom_call.1} parent=5 // pred_check_branch
        %120 = sbr.rel (%p117) target = $region24
      $region23: #{tpu_custom_call.1} parent=5 // pred_region
        %s121 = ssub.s32 %s17, 1
        // Predicated region
        $region25: #{tpu_custom_call.1} parent=23 // pred_check
          %p122 = pneg %p55
        $region26: #{tpu_custom_call.1} parent=23 // pred_check_branch
          %124 = sbr.rel (%p122) target = $region28
        $region27: #{tpu_custom_call.1} parent=23 // pred_region
          %125 = dma.done [#allocation7], 128
        $region28: #{tpu_custom_call.1} parent=23 // pred_fallthru
          _
        %p126 = pneg %p55
        %p127 = pneg %p52
        %p128 = pneg %p83
        %p129 = pneg %p80
        %s130 = sand.u32 %s70, 1
        %s131 = scalar_lea.sflag [#allocation8], %s130
        %s132 = sand.u32 %s70, 1
        %s133 = smul.addr %s132, 8
        %s134 = scalar_lea.vmem [#allocation9], %s133
        %s135 = smul.u32 %s27, 8
        %s136 = smul.u32 %s26, 8
        %s137 = sadd.s32 %s135, %s136
        %s138 = sld [smem:[#allocation5 + %s137]]
        %s139 = smul.addr %s138, 16
        %s140 = scalar_lea.hbm %s1, %s139
        // Predicated region
        $region29: #{tpu_custom_call.1} parent=23 // pred_check
          _
        $region30: #{tpu_custom_call.1} parent=23 // pred_check_branch
          %142 = sbr.rel target = $region32
        $region31: #{tpu_custom_call.1} parent=23 // pred_region
          %143 = sst [smem:[#allocation12]] [#allocation11]
          %144 = sst [smem:[#allocation13]] [#allocation10]
        $region32: #{tpu_custom_call.1} parent=23 // pred_fallthru
          _
        %146 = shalt.err (0)
        %s148 = sshll.u32 [#allocation2], 4
        %s149 = int_to_ptr.vmem [resolvable:$true] %s148
        %151 = dma.hbm_to_vmem [thread:$0]  %s140, 16, %s149, [#allocation3]
        %s152 = sadd.s32 %s137, 1
        %s153 = sld [smem:[#allocation5 + %s152]]
        %s154 = smul.addr %s153, 16
        %s155 = scalar_lea.hbm %s1, %s154
        %s156 = scalar_lea.vmem [#allocation2], 1
        %s157 = scalar_lea.sflag [#allocation3], 1
        // Predicated region
        $region33: #{tpu_custom_call.1} parent=23 // pred_check
          _
        $region34: #{tpu_custom_call.1} parent=23 // pred_check_branch
          %159 = sbr.rel target = $region36
        $region35: #{tpu_custom_call.1} parent=23 // pred_region
          %160 = sst [smem:[#allocation12]] [#allocation15]
          %161 = sst [smem:[#allocation13]] [#allocation14]
        $region36: #{tpu_custom_call.1} parent=23 // pred_fallthru
          _
        %163 = shalt.err (0)
        %s165 = sshll.u32 %s156, 4
        %s166 = int_to_ptr.vmem [resolvable:$true] %s165
        %168 = dma.hbm_to_vmem [thread:$0]  %s155, 16, %s166, %s157
        %s169 = sadd.s32 %s137, 2
        %s170 = sld [smem:[#allocation5 + %s169]]
        %s171 = smul.addr %s170, 16
        %s172 = scalar_lea.hbm %s1, %s171
        %s173 = scalar_lea.vmem [#allocation2], 2
        %s174 = scalar_lea.sflag [#allocation3], 2
        // Predicated region
        $region37: #{tpu_custom_call.1} parent=23 // pred_check
          _
        $region38: #{tpu_custom_call.1} parent=23 // pred_check_branch
          %176 = sbr.rel target = $region40
        $region39: #{tpu_custom_call.1} parent=23 // pred_region
          %177 = sst [smem:[#allocation12]] [#allocation17]
          %178 = sst [smem:[#allocation13]] [#allocation16]
        $region40: #{tpu_custom_call.1} parent=23 // pred_fallthru
          _
        %180 = shalt.err (0)
        %s182 = sshll.u32 %s173, 4
        %s183 = int_to_ptr.vmem [resolvable:$true] %s182
        %185 = dma.hbm_to_vmem [thread:$0]  %s172, 16, %s183, %s174
        %s186 = sadd.s32 %s137, 3
        %s187 = sld [smem:[#allocation5 + %s186]]
        %s188 = smul.addr %s187, 16
        %s189 = scalar_lea.hbm %s1, %s188
        %s190 = scalar_lea.vmem [#allocation2], 3
        %s191 = scalar_lea.sflag [#allocation3], 3
        // Predicated region
        $region41: #{tpu_custom_call.1} parent=23 // pred_check
          _
        $region42: #{tpu_custom_call.1} parent=23 // pred_check_branch
          %193 = sbr.rel target = $region44
        $region43: #{tpu_custom_call.1} parent=23 // pred_region
          %194 = sst [smem:[#allocation12]] [#allocation19]
          %195 = sst [smem:[#allocation13]] [#allocation18]
        $region44: #{tpu_custom_call.1} parent=23 // pred_fallthru
          _
        %197 = shalt.err (0)
        %s199 = sshll.u32 %s190, 4
        %s200 = int_to_ptr.vmem [resolvable:$true] %s199
        %202 = dma.hbm_to_vmem [thread:$0]  %s189, 16, %s200, %s191
        %s203 = sadd.s32 %s137, 4
        %s204 = sld [smem:[#allocation5 + %s203]]
        %s205 = smul.addr %s204, 16
        %s206 = scalar_lea.hbm %s1, %s205
        %s207 = scalar_lea.vmem [#allocation2], 4
        %s208 = scalar_lea.sflag [#allocation3], 4
        // Predicated region
        $region45: #{tpu_custom_call.1} parent=23 // pred_check
          _
        $region46: #{tpu_custom_call.1} parent=23 // pred_check_branch
          %210 = sbr.rel target = $region48
        $region47: #{tpu_custom_call.1} parent=23 // pred_region
          %211 = sst [smem:[#allocation12]] [#allocation21]
          %212 = sst [smem:[#allocation13]] [#allocation20]
        $region48: #{tpu_custom_call.1} parent=23 // pred_fallthru
          _
        %214 = shalt.err (0)
        %s216 = sshll.u32 %s207, 4
        %s217 = int_to_ptr.vmem [resolvable:$true] %s216
        %219 = dma.hbm_to_vmem [thread:$0]  %s206, 16, %s217, %s208
        %s220 = sadd.s32 %s137, 5
        %s221 = sld [smem:[#allocation5 + %s220]]
        %s222 = smul.addr %s221, 16
        %s223 = scalar_lea.hbm %s1, %s222
        %s224 = scalar_lea.vmem [#allocation2], 5
        %s225 = scalar_lea.sflag [#allocation3], 5
        // Predicated region
        $region49: #{tpu_custom_call.1} parent=23 // pred_check
          _
        $region50: #{tpu_custom_call.1} parent=23 // pred_check_branch
          %227 = sbr.rel target = $region52
        $region51: #{tpu_custom_call.1} parent=23 // pred_region
          %228 = sst [smem:[#allocation12]] [#allocation23]
          %229 = sst [smem:[#allocation13]] [#allocation22]
        $region52: #{tpu_custom_call.1} parent=23 // pred_fallthru
          _
        %231 = shalt.err (0)
        %s233 = sshll.u32 %s224, 4
        %s234 = int_to_ptr.vmem [resolvable:$true] %s233
        %236 = dma.hbm_to_vmem [thread:$0]  %s223, 16, %s234, %s225
        %s237 = sadd.s32 %s137, 6
        %s238 = sld [smem:[#allocation5 + %s237]]
        %s239 = smul.addr %s238, 16
        %s240 = scalar_lea.hbm %s1, %s239
        %s241 = scalar_lea.vmem [#allocation2], 6
        %s242 = scalar_lea.sflag [#allocation3], 6
        // Predicated region
        $region53: #{tpu_custom_call.1} parent=23 // pred_check
          _
        $region54: #{tpu_custom_call.1} parent=23 // pred_check_branch
          %244 = sbr.rel target = $region56
        $region55: #{tpu_custom_call.1} parent=23 // pred_region
          %245 = sst [smem:[#allocation12]] [#allocation25]
          %246 = sst [smem:[#allocation13]] [#allocation24]
        $region56: #{tpu_custom_call.1} parent=23 // pred_fallthru
          _
        %248 = shalt.err (0)
        %s250 = sshll.u32 %s241, 4
        %s251 = int_to_ptr.vmem [resolvable:$true] %s250
        %253 = dma.hbm_to_vmem [thread:$0]  %s240, 16, %s251, %s242
        %s254 = sadd.s32 %s137, 7
        %s255 = sld [smem:[#allocation5 + %s254]]
        %s256 = smul.addr %s255, 16
        %s257 = scalar_lea.hbm %s1, %s256
        %s258 = scalar_lea.vmem [#allocation2], 7
        %s259 = scalar_lea.sflag [#allocation3], 7
        // Predicated region
        $region57: #{tpu_custom_call.1} parent=23 // pred_check
          _
        $region58: #{tpu_custom_call.1} parent=23 // pred_check_branch
          %261 = sbr.rel target = $region60
        $region59: #{tpu_custom_call.1} parent=23 // pred_region
          %262 = sst [smem:[#allocation12]] [#allocation27]
          %263 = sst [smem:[#allocation13]] [#allocation26]
        $region60: #{tpu_custom_call.1} parent=23 // pred_fallthru
          _
        %265 = shalt.err (0)
        %s267 = sshll.u32 %s258, 4
        %s268 = int_to_ptr.vmem [resolvable:$true] %s267
        %270 = dma.hbm_to_vmem [thread:$0]  %s257, 16, %s268, %s259
        loop: start=0, step=1, limit=8
        $region61: #{tpu_custom_call.1} parent=23 // loop_pre_header
          _
        $region62: #{tpu_custom_call.1} parent=23 // loop_header
          %s272 = sphi 0, %s276
          %p273 = scmp.ge.s32.totalorder %s272, 8
        $region63: #{tpu_custom_call.1} parent=23 // loop_header_branch
          %275 = sbr.rel (%p273) target = $region67
        $region64: #{tpu_custom_call.1} parent=23 // loop_body
          %p277 = scmp.lt.s32.totalorder %s272, 0
          %s278 = ssub.s32 0, %s272
          %s279 = scalar_select %p277, %s278, %s272
          %s280 = sand.u32 %s279, 7
          %s281 = ssub.s32 0, %s280
          %s282 = scalar_select %p277, %s281, %s280
          %p283 = scmp.ne.s32.totalorder %s282, 0
          %p284 = scmp.lt.s32.totalorder %s282, 0
          %p285 = pnand %p284, %p283
          %p286 = pneg %p285
          %s287 = sadd.s32 %s282, 8
          %s288 = scalar_select %p286, %s287, %s282
          %s289 = scalar_lea.sflag [#allocation3], %s288
          %291 = dma.done %s289, 16
          %s292 = sadd.s32 %s272, 8
          %p293 = scmp.lt.s32.totalorder %s292, 8
          // Predicated region
          $region68: #{tpu_custom_call.1} parent=64 // pred_check
            %p294 = pneg %p293
          $region69: #{tpu_custom_call.1} parent=64 // pred_check_branch
            %296 = sbr.rel (%p294) target = $region71
          $region70: #{tpu_custom_call.1} parent=64 // pred_region
            %s297 = sadd.s32 %s137, %s292
            %s298 = sld [smem:[#allocation5 + %s297]]
            %p299 = scmp.lt.s32.totalorder %s292, 0
            %s300 = ssub.s32 0, %s292
            %s301 = scalar_select %p299, %s300, %s292
            %s302 = sand.u32 %s301, 7
            %s303 = ssub.s32 0, %s302
            %s304 = scalar_select %p299, %s303, %s302
            %p305 = scmp.ne.s32.totalorder %s304, 0
            %p306 = scmp.lt.s32.totalorder %s304, 0
            %p307 = pnand %p306, %p305
            %p308 = pneg %p307
            %s309 = sadd.s32 %s304, 8
            %s310 = scalar_select %p308, %s309, %s304
            %s311 = smul.addr %s298, 16
            %s312 = scalar_lea.hbm %s1, %s311
            %s313 = scalar_lea.vmem [#allocation2], %s292
            %s314 = scalar_lea.sflag [#allocation3], %s310
            // Predicated region
            $region72: #{tpu_custom_call.1} parent=70 // pred_check
              _
            $region73: #{tpu_custom_call.1} parent=70 // pred_check_branch
              %316 = sbr.rel target = $region75
            $region74: #{tpu_custom_call.1} parent=70 // pred_region
              %317 = sst [smem:[#allocation12]] [#allocation29]
              %318 = sst [smem:[#allocation13]] [#allocation28]
            $region75: #{tpu_custom_call.1} parent=70 // pred_fallthru
              _
            %320 = shalt.err (0)
            %s322 = sshll.u32 %s313, 4
            %s323 = int_to_ptr.vmem [resolvable:$true] %s322
            %325 = dma.hbm_to_vmem [thread:$0]  %s312, 16, %s323, %s314
          $region71: #{tpu_custom_call.1} parent=64 // pred_fallthru
            _
        $region65: #{tpu_custom_call.1} parent=23 // loop_footer
          %s276 = sadd.s32 1, %s272
        $region66: #{tpu_custom_call.1} parent=23 // loop_footer_branch
          %271 = sbr.rel target = $region62
        $region67: #{tpu_custom_call.1} parent=23 // loop_exit
          _
        %v326 = vld [vmem:[#allocation2] sm:$0xff]
        %v327 = vld [vmem:[#allocation6] sm:$0xff]
        %v328 = vadd.f32 %v326, %v327
        %329 = vst [vmem:[%s134] sm:$0xff] %v328
        %s330 = sand.u32 %s70, 1
        %s331 = scalar_lea.sflag [#allocation8], %s330
        %s332 = sand.u32 %s70, 1
        %s333 = smul.addr %s332, 8
        %s334 = scalar_lea.vmem [#allocation9], %s333
        // Predicated region
        $region76: #{tpu_custom_call.1} parent=23 // pred_check
          %p335 = pneg %p80
        $region77: #{tpu_custom_call.1} parent=23 // pred_check_branch
          %337 = sbr.rel (%p335) target = $region79
        $region78: #{tpu_custom_call.1} parent=23 // pred_region
          %s339 = ssub.s32 128, 128
          %340 = vsyncadd %s331, %s339
          %s341 = sadd.s32 %s26, %s27
          %s342 = smul.addr %s341, 128
          %s343 = scalar_lea.hbm %s3, %s342
          %s345 = sshll.u32 %s334, 4
          %s346 = int_to_ptr.vmem [resolvable:$true] %s345
          %348 = dma.vmem_to_hbm [thread:$0]  %s346, 128, %s343, %s331
        $region79: #{tpu_custom_call.1} parent=23 // pred_fallthru
          _
      $region24: #{tpu_custom_call.1} parent=5 // pred_fallthru
        _
      %p349 = scmp.le.s32.totalorder 2, %s17
      // Predicated region
      $region80: #{tpu_custom_call.1} parent=5 // pred_check
        %p350 = pneg %p349
      $region81: #{tpu_custom_call.1} parent=5 // pred_check_branch
        %352 = sbr.rel (%p350) target = $region83
      $region82: #{tpu_custom_call.1} parent=5 // pred_region
        %s353 = ssub.s32 %s17, 2
        // Predicated region
        $region84: #{tpu_custom_call.1} parent=82 // pred_check
          %p354 = pneg %p86
        $region85: #{tpu_custom_call.1} parent=82 // pred_check_branch
          %356 = sbr.rel (%p354) target = $region87
        $region86: #{tpu_custom_call.1} parent=82 // pred_region
          %s357 = sand.u32 %s71, 1
          %s358 = scalar_lea.sflag [#allocation8], %s357
          %s359 = sand.u32 %s71, 1
          %s360 = smul.addr %s359, 8
          %s361 = scalar_lea.vmem [#allocation9], %s360
          %362 = dma.done %s358, 128
        $region87: #{tpu_custom_call.1} parent=82 // pred_fallthru
          _
      $region83: #{tpu_custom_call.1} parent=5 // pred_fallthru
        _
    $region6: #{tpu_custom_call.1} parent=1 // loop_footer
      %s21 = sadd.s32 1, %s17
    $region7: #{tpu_custom_call.1} parent=1 // loop_footer_branch
      %16 = sbr.rel target = $region3
    $region8: #{tpu_custom_call.1} parent=1 // loop_exit
      _
    %363 = vsyncpa [#allocation7], 1
    %s364 = scalar_lea.sflag [#allocation7], 1
    %365 = vsyncpa %s364, 1
    %366 = vsyncpa [#allocation8], 1
    %s367 = scalar_lea.sflag [#allocation8], 1
    %368 = vsyncpa %s367, 1
  %369 = vsyncmov [#allocation3]
  %s370 = vpop.sfrf %369
  %p371 = scmp.eq.s32.totalorder %s370, 0
  %p372 = pneg %p371
  %374 = shalt.err (%p372)
  %s375 = scalar_lea.sflag [#allocation3], 1
  %376 = vsyncmov %s375
  %s377 = vpop.sfrf %376
  %p378 = scmp.eq.s32.totalorder %s377, 0
  %p379 = pneg %p378
  %381 = shalt.err (%p379)
  %s382 = scalar_lea.sflag [#allocation3], 2
  %383 = vsyncmov %s382
  %s384 = vpop.sfrf %383
  %p385 = scmp.eq.s32.totalorder %s384, 0
  %p386 = pneg %p385
  %388 = shalt.err (%p386)
  %s389 = scalar_lea.sflag [#allocation3], 3
  %390 = vsyncmov %s389
  %s391 = vpop.sfrf %390
  %p392 = scmp.eq.s32.totalorder %s391, 0
  %p393 = pneg %p392
  %395 = shalt.err (%p393)
  %s396 = scalar_lea.sflag [#allocation3], 4
  %397 = vsyncmov %s396
  %s398 = vpop.sfrf %397
  %p399 = scmp.eq.s32.totalorder %s398, 0
  %p400 = pneg %p399
  %402 = shalt.err (%p400)
  %s403 = scalar_lea.sflag [#allocation3], 5
  %404 = vsyncmov %s403
  %s405 = vpop.sfrf %404
  %p406 = scmp.eq.s32.totalorder %s405, 0
  %p407 = pneg %p406
  %409 = shalt.err (%p407)
  %s410 = scalar_lea.sflag [#allocation3], 6
  %411 = vsyncmov %s410
  %s412 = vpop.sfrf %411
  %p413 = scmp.eq.s32.totalorder %s412, 0
  %p414 = pneg %p413
  %416 = shalt.err (%p414)
  %s417 = scalar_lea.sflag [#allocation3], 7
  %418 = vsyncmov %s417
  %s419 = vpop.sfrf %418
  %p420 = scmp.eq.s32.totalorder %s419, 0
  %p421 = pneg %p420
  %423 = shalt.err (%p421)

</llo_original>
